<compile_context>
chip_gen: v7x
topology: tpu7x:2x2x1
jax: 0.10.0
libtpu: 0.0.40
codegen_flags: <defaults>
</compile_context>

<pallas_src>
import functools
import math

import jax
import jax.numpy as jnp
from jax import lax
from jax.experimental import pallas as pl
from jax.experimental.pallas import tpu as pltpu

EPS = 1e-5


def _tpu_vmem_capacity_bytes():
    try:
        return int(pltpu.get_tpu_info().vmem_capacity_bytes)
    except Exception:
        return 64 * 1024 * 1024          # conservative (v7x-sized) fallback


_VMEM_CAP = _tpu_vmem_capacity_bytes()
if _VMEM_CAP >= 128 * 1024 * 1024:       # v5e / v6e: 128 MiB physical VMEM
    VMEM_LIMIT_BYTES = 96 * 1024 * 1024
    ROW_TILE_CAP = 1024
else:                                    # v7x: 64 MiB physical VMEM
    VMEM_LIMIT_BYTES = 32 * 1024 * 1024
    ROW_TILE_CAP = 512

_COMPILER_PARAMS = pltpu.CompilerParams(
    dimension_semantics=("parallel",),   # megacore: shard the grid over TCs
    vmem_limit_bytes=VMEM_LIMIT_BYTES,
)


def _row_tile(rows, cap):
    """Largest multiple-of-8 divisor of `rows` that is <= cap.

    If none exists (ragged row count), return a *bounded* multiple-of-8 tile
    and ragged=True; callers then use a ceil-div grid with in-kernel masking
    of the stats — the tile is never silently the whole activation."""
    cap8 = max(8, cap - cap % 8)
    t = cap8
    while t >= 8:
        if rows % t == 0:
            return t, False
        t -= 8
    return min(cap8, ((rows + 7) // 8) * 8), True


def _partial_stats(ps_ref, y, valid=None):
    """Per-tile BN partials of the f32 accumulator y (rows, C).

    ps = [per-channel sum | per-channel M2 about the tile mean], shape (1, 2C).
    Tile-local centering + Chan's merge in the finalize avoids the
    catastrophic cancellation of a single-pass E[x^2] - E[x]^2."""
    if valid is None:
        s = jnp.sum(y, axis=0, keepdims=True)
        m = s * (1.0 / y.shape[0])
        m2 = jnp.sum((y - m) ** 2, axis=0, keepdims=True)
    else:
        yv = jnp.where(valid, y, 0.0)
        s = jnp.sum(yv, axis=0, keepdims=True)
        cnt = jnp.maximum(jnp.sum(valid.astype(jnp.float32)), 1.0)
        m = s / cnt
        m2 = jnp.sum(jnp.where(valid, (y - m) ** 2, 0.0), axis=0, keepdims=True)
    ps_ref[...] = jnp.concatenate([s, m2], axis=-1)


# ---------------------------------------------------------------------------
# 1x1 conv == matmul over flattened (N*H*W, C) rows, optionally fusing the
# previous stage's BatchNorm (scale/shift) + ReLU on the input.
# ---------------------------------------------------------------------------
def _pw_conv_kernel(*refs, fused, rows_total, tile_rows, ragged):
    if fused:
        x_ref, s_ref, t_ref, w_ref, o_ref, ps_ref = refs
    else:
        x_ref, w_ref, o_ref, ps_ref = refs
    x = x_ref[...]
    if fused:
        x = jnp.maximum(x * s_ref[...] + t_ref[...], 0.0)       # BN + ReLU, f32
    y = jnp.dot(x.astype(jnp.bfloat16), w_ref[...],             # bf16 MXU, f32 acc
                preferred_element_type=jnp.float32)
    o_ref[...] = y.astype(o_ref.dtype)                          # bf16/f32 store
    if ragged:
        rid = (pl.program_id(0) * tile_rows
               + lax.broadcasted_iota(jnp.int32, (tile_rows, 1), 0))
        _partial_stats(ps_ref, y, valid=rid < rows_total)
    else:
        _partial_stats(ps_ref, y)


def _pw_conv(x2, w_bf16, tile_rows, *, scale=None, shift=None,
             out_dtype=jnp.float32):
    R, Cin = x2.shape
    Cout = w_bf16.shape[1]
    ragged = (R % tile_rows) != 0
    n_tiles = (R + tile_rows - 1) // tile_rows
    fused = scale is not None

    in_specs = [pl.BlockSpec((tile_rows, Cin), lambda i: (i, 0))]
    args = [x2]
    if fused:
        in_specs += [pl.BlockSpec((1, Cin), lambda i: (0, 0)),
                     pl.BlockSpec((1, Cin), lambda i: (0, 0))]
        args += [scale, shift]
    in_specs.append(pl.BlockSpec((Cin, Cout), lambda i: (0, 0)))  # bf16 weights resident
    args.append(w_bf16)

    return pl.pallas_call(
        functools.partial(_pw_conv_kernel, fused=fused, rows_total=R,
                          tile_rows=tile_rows, ragged=ragged),
        grid=(n_tiles,),
        in_specs=in_specs,
        out_specs=(pl.BlockSpec((tile_rows, Cout), lambda i: (i, 0)),
                   pl.BlockSpec((None, 1, 2 * Cout), lambda i: (i, 0, 0))),
        out_shape=(jax.ShapeDtypeStruct((R, Cout), out_dtype),
                   jax.ShapeDtypeStruct((n_tiles, 1, 2 * Cout), jnp.float32)),
        compiler_params=_COMPILER_PARAMS,
    )(*args)


# ---------------------------------------------------------------------------
# 3x3 / stride-1 / pad-1 conv: bn1+relu fused on the input, then a single
# im2col matmul (K = 9*planes) per image.  The halo and the im2col slab are
# built entirely in bf16, so the largest per-step VMEM temporary is halved.
# TODO(synk): at very large spatial sizes on v7x, tile H with a 1-row halo
#             (or 9 MRB-accumulated shifted matmuls) to bound per-step VMEM
#             and multiply grid parallelism.
# ---------------------------------------------------------------------------
def _conv3x3_kernel(x_ref, s_ref, t_ref, w_ref, o_ref, ps_ref):
    H, W, P = x_ref.shape
    a = jnp.maximum(x_ref[...] * s_ref[...] + t_ref[...], 0.0)   # BN1+ReLU, f32
    a = a.astype(jnp.bfloat16)                                   # bf16 from here on
    zr = jnp.zeros((1, W, P), jnp.bfloat16)
    zc = jnp.zeros((H + 2, 1, P), jnp.bfloat16)
    ap = jnp.concatenate([zr, a, zr], axis=0)                    # halo rows
    ap = jnp.concatenate([zc, ap, zc], axis=1)                   # halo cols
    patches = [ap[ky:ky + H, kx:kx + W, :] for ky in range(3) for kx in range(3)]
    slab = jnp.concatenate(patches, axis=-1).reshape(H * W, 9 * P)   # bf16 im2col
    y = jnp.dot(slab, w_ref[...], preferred_element_type=jnp.float32)
    o_ref[...] = y.reshape(H, W, P).astype(o_ref.dtype)          # bf16 store
    _partial_stats(ps_ref, y)                                    # stats from f32 acc


def _conv3x3(o1_img, scale, shift, w2_bf16):
    N, H, W, P = o1_img.shape
    return pl.pallas_call(
        _conv3x3_kernel,
        grid=(N,),
        in_specs=[pl.BlockSpec((None, H, W, P), lambda n: (n, 0, 0, 0)),
                  pl.BlockSpec((1, P), lambda n: (0, 0)),
                  pl.BlockSpec((1, P), lambda n: (0, 0)),
                  pl.BlockSpec((9 * P, P), lambda n: (0, 0))],
        out_specs=(pl.BlockSpec((None, H, W, P), lambda n: (n, 0, 0, 0)),
                   pl.BlockSpec((None, 1, 2 * P), lambda n: (n, 0, 0))),
        out_shape=(jax.ShapeDtypeStruct((N, H, W, P), jnp.bfloat16),
                   jax.ShapeDtypeStruct((N, 1, 2 * P), jnp.float32)),
        compiler_params=_COMPILER_PARAMS,
    )(o1_img, scale, shift, w2_bf16)


# ---------------------------------------------------------------------------
# Tiny BN finalize kernel: merge per-tile (sum, M2) with Chan's parallel
# formula into per-channel scale/shift (training-mode BN: batch mean, biased
# variance, affine).  Handles a ragged last tile via min(count, remaining).
# ---------------------------------------------------------------------------
def _bn_finalize_kernel(ps_ref, g_ref, b_ref, scale_ref, shift_ref, *,
                        count_per_tile, total):
    C = g_ref.shape[-1]
    ps = ps_ref[...]                        # (T, 1, 2C)
    T = ps.shape[0]
    sums = ps[:, 0, :C]                     # per-tile channel sums
    m2s = ps[:, 0, C:]                      # per-tile M2 about the tile mean
    idx = lax.broadcasted_iota(jnp.float32, (T, 1), 0)
    cnt = jnp.minimum(float(count_per_tile),
                      float(total) - idx * float(count_per_tile))
    mean = jnp.sum(sums, axis=0, keepdims=True) / float(total)
    tmean = sums / cnt
    m2 = (jnp.sum(m2s, axis=0, keepdims=True)
          + jnp.sum(cnt * (tmean - mean) ** 2, axis=0, keepdims=True))
    var = jnp.maximum(m2 / float(total), 0.0)     # biased var (torch training BN)
    scale = g_ref[...] * lax.rsqrt(var + EPS)
    scale_ref[...] = scale
    shift_ref[...] = b_ref[...] - mean * scale


def _bn_scale_shift(ps, gamma, beta, *, count_per_tile, total):
    C = gamma.shape[-1]
    vmem = pl.BlockSpec(memory_space=pltpu.MemorySpace.VMEM)
    return pl.pallas_call(
        functools.partial(_bn_finalize_kernel,
                          count_per_tile=count_per_tile, total=total),
        in_specs=[vmem, vmem, vmem],
        out_specs=(vmem, vmem),
        out_shape=(jax.ShapeDtypeStruct((1, C), jnp.float32),
                   jax.ShapeDtypeStruct((1, C), jnp.float32)),
    )(ps, gamma, beta)


# ---------------------------------------------------------------------------
# Epilogue: bn3 + identity residual + ReLU on a lane-dense folded layout
# (fold rows so the last dim is a multiple of 128 -> unmasked vector stores).
# ---------------------------------------------------------------------------
def _residual_kernel(y_ref, x_ref, s_ref, t_ref, o_ref):
    o_ref[...] = jnp.maximum(y_ref[...] * s_ref[...] + t_ref[...] + x_ref[...], 0.0)


def _bn_add_relu(o3, x2, scale, shift):
    R, C = o3.shape
    f = 128 // math.gcd(128, C)
    if R % f != 0:
        f = 1   # TODO(synk): pad rows for odd channel counts to keep dense stores
    L, RF = C * f, R // f
    y = o3.reshape(RF, L)                # wrapper-side reshape: layout plumbing only
    xr = x2.reshape(RF, L)
    s = jnp.tile(scale, (1, f))          # lane index w*C + c -> scale[c]
    t = jnp.tile(shift, (1, f))
    tr, _ = _row_tile(RF, ROW_TILE_CAP)
    out = pl.pallas_call(
        _residual_kernel,
        grid=((RF + tr - 1) // tr,),
        in_specs=[pl.BlockSpec((tr, L), lambda i: (i, 0)),
                  pl.BlockSpec((tr, L), lambda i: (i, 0)),
                  pl.BlockSpec((1, L), lambda i: (0, 0)),
                  pl.BlockSpec((1, L), lambda i: (0, 0))],
        out_specs=pl.BlockSpec((tr, L), lambda i: (i, 0)),
        out_shape=jax.ShapeDtypeStruct((RF, L), jnp.float32),
        compiler_params=_COMPILER_PARAMS,
    )(y, xr, s, t)
    return out.reshape(R, C)


def bottleneck(x_nhwc, params):
    """PyTorch Bottleneck forward (stride=1, downsample=None), training-mode
    BatchNorm semantics, NHWC layout."""
    w1, w2, w3, g1, b1, g2, b2, g3, b3 = params
    N, H, W, Cin = x_nhwc.shape
    P = w1.shape[1]
    Cout = w3.shape[1]
    assert Cin == Cout, "identity residual requires inplanes == planes * expansion"
    R = N * H * W

    # Pre-cast conv weights to bf16 once: halves weight DMA / resident VMEM
    # and removes the per-step constant-block cast inside the kernels.
    w1b = w1.astype(jnp.bfloat16)
    w2b = w2.reshape(9 * P, P).astype(jnp.bfloat16)
    w3b = w3.astype(jnp.bfloat16)

    x2 = x_nhwc.reshape(R, Cin)
    tr, _ = _row_tile(R, ROW_TILE_CAP)

    # conv1 (1x1) -> bf16 activation + partial bn1 stats (from f32 accumulator)
    o1, ps1 = _pw_conv(x2, w1b, tr, out_dtype=jnp.bfloat16)
    s1, t1 = _bn_scale_shift(ps1, g1, b1, count_per_tile=tr, total=R)

    # bn1+relu fused into conv2 (3x3, bf16 im2col matmul) + partial bn2 stats
    o2, ps2 = _conv3x3(o1.reshape(N, H, W, P), s1, t1, w2b)
    s2, t2 = _bn_scale_shift(ps2, g2, b2, count_per_tile=H * W, total=R)

    # bn2+relu fused into conv3 (1x1) -> f32 activation + partial bn3 stats
    o3, ps3 = _pw_conv(o2.reshape(R, P), w3b, tr, scale=s2, shift=t2,
                       out_dtype=jnp.float32)
    s3, t3 = _bn_scale_shift(ps3, g3, b3, count_per_tile=tr, total=R)

    # bn3 + residual add + final relu (lane-dense epilogue)
    out = _bn_add_relu(o3, x2, s3, t3)
    return out.reshape(N, H, W, Cout)


def reference_forward(x_nhwc, params):
    """Pure-JAX reference of the PyTorch Bottleneck forward (training-mode BN).

    Conv/matmul inputs are cast to bf16 with f32 accumulation to mirror the
    kernel's MXU input precision; BN / residual math stays in f32."""
    w1, w2, w3, g1, b1, g2, b2, g3, b3 = params
    bf = jnp.bfloat16

    def bn(y, g, b):
        m = y.mean(axis=(0, 1, 2), keepdims=True)
        v = ((y - m) ** 2).mean(axis=(0, 1, 2), keepdims=True)   # biased var (torch)
        return (y - m) * lax.rsqrt(v + EPS) * g.reshape(1, 1, 1, -1) \
            + b.reshape(1, 1, 1, -1)

    o = jnp.einsum('nhwc,co->nhwo', x_nhwc.astype(bf), w1.astype(bf),
                   preferred_element_type=jnp.float32)
    o = jax.nn.relu(bn(o, g1, b1))
    w2_hwio = w2.reshape(3, 3, w2.shape[1], w2.shape[2])          # [ky,kx,I,O]
    o = lax.conv_general_dilated(o.astype(bf), w2_hwio.astype(bf), (1, 1), 'SAME',
                                 dimension_numbers=('NHWC', 'HWIO', 'NHWC'),
                                 preferred_element_type=jnp.float32)
    o = jax.nn.relu(bn(o, g2, b2))
    o = jnp.einsum('nhwc,co->nhwo', o.astype(bf), w3.astype(bf),
                   preferred_element_type=jnp.float32)
    o = bn(o, g3, b3)
    return jax.nn.relu(o + x_nhwc)


if __name__ == "__main__":
    key = jax.random.PRNGKey(0)
    N, H, W = 2, 8, 8
    planes = 4
    expansion = 4
    inplanes = planes * expansion          # 16 — required for identity residual

    k = jax.random.split(key, 10)
    # PyTorch-convention input is NCHW; transpose to the kernel's NHWC layout.
    x_nchw = jax.random.normal(k[0], (N, inplanes, H, W), jnp.float32)
    x_nhwc = jnp.transpose(x_nchw, (0, 2, 3, 1))

    # Deterministic synthetic parameters (shapes follow the module's __init__).
    # conv weights stored as (Cin, Cout) / (9, Cin, Cout) for matmul use.
    w1 = 0.1 * jax.random.normal(k[1], (inplanes, planes), jnp.float32)
    w2 = 0.1 * jax.random.normal(k[2], (9, planes, planes), jnp.float32)
    w3 = 0.1 * jax.random.normal(k[3], (planes, planes * expansion), jnp.float32)
    g1 = 1.0 + 0.1 * jax.random.normal(k[4], (1, planes), jnp.float32)
    b1 = 0.1 * jax.random.normal(k[5], (1, planes), jnp.float32)
    g2 = 1.0 + 0.1 * jax.random.normal(k[6], (1, planes), jnp.float32)
    b2 = 0.1 * jax.random.normal(k[7], (1, planes), jnp.float32)
    g3 = 1.0 + 0.1 * jax.random.normal(k[8], (1, planes * expansion), jnp.float32)
    b3 = 0.1 * jax.random.normal(k[9], (1, planes * expansion), jnp.float32)
    # TODO(synk): BatchNorm running-stat (running_mean/var, momentum) buffer
    # updates are a training side-effect and are not reproduced in the kernel.

    params = (w1, w2, w3, g1, b1, g2, b2, g3, b3)

    out = jax.block_until_ready(bottleneck(x_nhwc, params))
    ref = jax.block_until_ready(reference_forward(x_nhwc, params))

    assert out.shape == (N, H, W, planes * expansion)
    # Tolerance accounts for bf16 MXU inputs (kernel & reference) plus the
    # kernel's bf16 storage of the two inter-stage activations.
    assert jnp.allclose(out, ref, atol=3e-2, rtol=3e-2), (
        float(jnp.max(jnp.abs(out - ref))))
    print("KERNEL_OK")
</pallas_src>

<mosaic_0001>
module attributes {stable_mosaic.version = 11 : i64} {
  func.func @_pw_conv_kernel(%arg0: i32, %arg1: memref<128x16xf32, #tpu.memory_space<vmem>>, %arg2: memref<16x4xbf16, #tpu.memory_space<vmem>>, %arg3: memref<128x4xbf16, #tpu.memory_space<vmem>>, %arg4: memref<1x1x8xf32, #tpu.memory_space<vmem>>) attributes {dimension_semantics = [#tpu.dimension_semantics<parallel>], iteration_bounds = array<i64: 1>, scalar_prefetch = 0 : i64, scratch_operands = 0 : i64, tpu.core_type = #tpu.core_type<tc>, window_params = [{transform_indices = @transform_0, window_bounds = array<i64: 128, 16>}, {pipeline_mode = #tpu.pipeline_mode<synchronous>, transform_indices = @transform_1, window_bounds = array<i64: 16, 4>}, {transform_indices = @transform_2, window_bounds = array<i64: 128, 4>}, {transform_indices = @transform_3, window_bounds = array<i64: 1, 1, 8>}]} {
    %c0 = arith.constant 0 : index
    %c0_0 = arith.constant 0 : index
    %0 = vector.load %arg1[%c0, %c0_0] : memref<128x16xf32, #tpu.memory_space<vmem>>, vector<128x16xf32>
    %1 = arith.truncf %0 : vector<128x16xf32> to vector<128x16xbf16>
    %c0_1 = arith.constant 0 : index
    %c0_2 = arith.constant 0 : index
    %2 = vector.load %arg2[%c0_1, %c0_2] : memref<16x4xbf16, #tpu.memory_space<vmem>>, vector<16x4xbf16>
    %cst = arith.constant dense<0.000000e+00> : vector<128x4xf32>
    %3 = tpu.matmul %1, %2, %cst {dimension_numbers = #tpu.dot_dimension_numbers<[1], [0], [0], [1], [0, 0, 1, 1], [], []>} : vector<128x16xbf16>, vector<16x4xbf16>, vector<128x4xf32> -> vector<128x4xf32>
    %4 = arith.truncf %3 : vector<128x4xf32> to vector<128x4xbf16>
    %c0_3 = arith.constant 0 : index
    %c0_4 = arith.constant 0 : index
    %5 = vector.load %arg3[%c0_3, %c0_4] : memref<128x4xbf16, #tpu.memory_space<vmem>>, vector<128x4xbf16>
    tpu.vector_store %arg3[%c0_3, %c0_4], %4 {strides = array<i32>} : memref<128x4xbf16, #tpu.memory_space<vmem>>, vector<128x4xbf16>,
    %cst_5 = arith.constant dense<0.000000e+00> : vector<4xf32>
    %6 = vector.multi_reduction <add>, %3, %cst_5 [0] : vector<128x4xf32> to vector<4xf32>
    %7 = vector.shape_cast %6 : vector<4xf32> to vector<1x4xf32>
    %cst_6 = arith.constant 7.812500e-03 : f32
    %8 = vector.broadcast %cst_6 : f32 to vector<1x4xf32>
    %9 = arith.mulf %7, %8 : vector<1x4xf32>
    %10 = vector.broadcast %9 : vector<1x4xf32> to vector<128x4xf32>
    %11 = arith.subf %3, %10 : vector<128x4xf32>
    %12 = arith.mulf %11, %11 : vector<128x4xf32>
    %cst_7 = arith.constant dense<0.000000e+00> : vector<4xf32>
    %13 = vector.multi_reduction <add>, %12, %cst_7 [0] : vector<128x4xf32> to vector<4xf32>
    %14 = vector.shape_cast %13 : vector<4xf32> to vector<1x4xf32>
    %15 = tpu.concatenate %7, %14 in 1 : vector<1x4xf32>, vector<1x4xf32> -> vector<1x8xf32>
    %c0_8 = arith.constant 0 : index
    %c0_9 = arith.constant 0 : index
    %c0_10 = arith.constant 0 : index
    %16 = vector.load %arg4[%c0_8, %c0_9, %c0_10] : memref<1x1x8xf32, #tpu.memory_space<vmem>>, vector<1x1x8xf32>
    %17 = vector.shape_cast %16 : vector<1x1x8xf32> to vector<1x8xf32>
    %18 = vector.shape_cast %15 : vector<1x8xf32> to vector<1x1x8xf32>
    tpu.vector_store %arg4[%c0_8, %c0_9, %c0_10], %18 {strides = array<i32>} : memref<1x1x8xf32, #tpu.memory_space<vmem>>, vector<1x1x8xf32>,
    return
  }
  func.func @transform_0(%arg0: i32) -> (i32, i32) {
    %c0_i32 = arith.constant 0 : i32
    %c0_i32_0 = arith.constant 0 : i32
    return %arg0, %c0_i32 : i32, i32
  }
  func.func @transform_1(%arg0: i32) -> (i32, i32) {
    %c0_i32 = arith.constant 0 : i32
    %c0_i32_0 = arith.constant 0 : i32
    %c0_i32_1 = arith.constant 0 : i32
    return %c0_i32, %c0_i32_0 : i32, i32
  }
  func.func @transform_2(%arg0: i32) -> (i32, i32) {
    %c0_i32 = arith.constant 0 : i32
    %c0_i32_0 = arith.constant 0 : i32
    return %arg0, %c0_i32 : i32, i32
  }
  func.func @transform_3(%arg0: i32) -> (i32, i32, i32) {
    %c0_i32 = arith.constant 0 : i32
    %c0_i32_0 = arith.constant 0 : i32
    %c0_i32_1 = arith.constant 0 : i32
    return %arg0, %c0_i32, %c0_i32_0 : i32, i32, i32
  }
}

</mosaic_0001>

<llo_original>
// kernel: tpu_custom_call.1
$region0: #{tpu_custom_call.1}
  #allocation0 [shape = 'u32[]', space=smem, size = 0x4, offset = 0x4, fixed_abs, tag = 'smem constant byte address 0x4 - core index']
  #allocation1 [shape = 'u32[144,128]{1,0:T(1,128)}', space=vmem, size = 0x12000, scoped, tag = 'internal scratch']
  %s0 = inlined_call_operand.vmem [shape: f32[128,16], index: 0, kind: input, shape index: {}]
  %s1 = inlined_call_operand.vmem [shape: bf16[16,4], index: 1, kind: input, shape index: {}]
  %s2 = inlined_call_operand.vmem [shape: bf16[128,4], index: 2, kind: output, shape index: {0}]
  %s3 = inlined_call_operand.hbm [shape: f32[1,1,8], index: 3, kind: output, shape index: {1}]
  %4 = xla_tuple %s2, %s3
  %s5 = sld [smem:[#allocation0]]
  $region26: #{tpu_custom_call.1} parent=0
    _
  %s7 = ssub.s32 1, %s5
  %s8 = scalar_select 0, %s7, %s5
  $region1: #{tpu_custom_call.1} parent=0
    #allocation2 [shape = 'u8[512]{0}', space=vmem, size = 0x400, scoped, tag = 'output window, operand 1, single buffered']
    #allocation3 [shape = 's32[1]{0}', space=sflag, size = 0x4, scoped, tag = 'scoped memory for tpu_custom_call.1']
    %9 = vsyncpa [#allocation3], 0
    // Predicated region
    $region2: #{tpu_custom_call.1} parent=1 // pred_check
      _
    $region3: #{tpu_custom_call.1} parent=1 // pred_check_branch
      %11 = sbr.rel (0) target = $region5
    $region4: #{tpu_custom_call.1} parent=1 // pred_region
      _
    $region5: #{tpu_custom_call.1} parent=1 // pred_fallthru
      _
    // Predicated region
    $region6: #{tpu_custom_call.1} parent=1 // pred_check
      _
    $region7: #{tpu_custom_call.1} parent=1 // pred_check_branch
      %13 = sbr.rel (0) target = $region9
    $region8: #{tpu_custom_call.1} parent=1 // pred_region
      _
    $region9: #{tpu_custom_call.1} parent=1 // pred_fallthru
      _
    %v15 = vld [vmem:[%s0] sm:$0xff]
    %v16 = vld [vmem:[%s0 + $0x8] sm:$0xff]
    %v17 = vld [vmem:[%s0 + $0x10] sm:$0xff]
    %v18 = vld [vmem:[%s0 + $0x18] sm:$0xff]
    %v19 = vld [vmem:[%s0 + $0x20] sm:$0xff]
    %v20 = vld [vmem:[%s0 + $0x28] sm:$0xff]
    %v21 = vld [vmem:[%s0 + $0x30] sm:$0xff]
    %v22 = vld [vmem:[%s0 + $0x38] sm:$0xff]
    %v23 = vld [vmem:[%s0 + $0x40] sm:$0xff]
    %v24 = vld [vmem:[%s0 + $0x48] sm:$0xff]
    %v25 = vld [vmem:[%s0 + $0x50] sm:$0xff]
    %v26 = vld [vmem:[%s0 + $0x58] sm:$0xff]
    %v27 = vld [vmem:[%s0 + $0x60] sm:$0xff]
    %v28 = vld [vmem:[%s0 + $0x68] sm:$0xff]
    %v29 = vld [vmem:[%s0 + $0x70] sm:$0xff]
    %v30 = vld [vmem:[%s0 + $0x78] sm:$0xff]
    %v31 = vpack.c.bf16 %v16, %v15
    %v32 = vpack.c.bf16 %v18, %v17
    %v33 = vpack.c.bf16 %v20, %v19
    %v34 = vpack.c.bf16 %v22, %v21
    %v35 = vpack.c.bf16 %v24, %v23
    %v36 = vpack.c.bf16 %v26, %v25
    %v37 = vpack.c.bf16 %v28, %v27
    %v38 = vpack.c.bf16 %v30, %v29
    %v39 = vld [vmem:[%s1] sm:$0xf]
    %v40 = vld [vmem:[%s1 + $0x4] sm:$0xf]
    %v43 = vunpack.c.l.b16 %v39
    %v44 = vunpack.c.l.b16 %v40
    %v45 = vpack.c.b16 %v44, %v43
    %vm47 = vcmask 130048
    %v49 = vsel %vm47, %v31, 0
    %v52 = vsel %vm47, %v32, 0
    %v55 = vsel %vm47, %v33, 0
    %v58 = vsel %vm47, %v34, 0
    %v61 = vsel %vm47, %v35, 0
    %v64 = vsel %vm47, %v36, 0
    %v67 = vsel %vm47, %v37, 0
    %v70 = vsel %vm47, %v38, 0
    %72 = vmatprep.subr.bf16.mxu0 0
    %73 = vmatpush1.bf16.msra.mxu0 %v45
    %74 = vmatprep.subr.bf16.mxu0 0
    %75 = vmatpush1.bf16.msra.mxu0 0
    %76 = vmatprep.subr.bf16.mxu0 0
    %77 = vmatpush1.bf16.msra.mxu0 0
    %78 = vmatprep.subr.bf16.mxu0 0
    %79 = vmatpush1.bf16.msra.mxu0 0
    %80 = vmatprep.subr.bf16.mxu0 0
    %81 = vmatpush1.bf16.msra.mxu0 0
    %82 = vmatprep.subr.bf16.mxu0 0
    %83 = vmatpush1.bf16.msra.mxu0 0
    %84 = vmatprep.subr.bf16.mxu0 0
    %85 = vmatpush1.bf16.msra.mxu0 0
    %86 = vmatprep.subr.bf16.mxu0 0
    %87 = vmatpush1.bf16.msra.mxu0 0
    %88 = vmatprep.subr.bf16.mxu0 0
    %89 = vmatpush1.bf16.msra.mxu0 0
    %90 = vmatprep.subr.bf16.mxu0 0
    %91 = vmatpush1.bf16.msra.mxu0 0
    %92 = vmatprep.subr.bf16.mxu0 0
    %93 = vmatpush1.bf16.msra.mxu0 0
    %94 = vmatprep.subr.bf16.mxu0 0
    %95 = vmatpush1.bf16.msra.mxu0 0
    %96 = vmatprep.subr.bf16.mxu0 0
    %97 = vmatpush1.bf16.msra.mxu0 0
    %98 = vmatprep.subr.bf16.mxu0 0
    %99 = vmatpush1.bf16.msra.mxu0 0
    %100 = vmatprep.subr.bf16.mxu0 0
    %101 = vmatpush1.bf16.msra.mxu0 0
    %102 = vmatprep.subr.bf16.mxu0 0
    %103 = vmatpush1.bf16.msra.mxu0 0
    %104 = vmatprep.mubr.bf16.mxu0 0
    %105 = vmatmul.mubr.bf16.gmra.mrb[0].mxu0 %v49
    %v106 = vpop.f32.mrb[0].mxu0
    %v107 = vadd.f32 0.0, %v106
    %v108 = vpop.f32.mrb[0].mxu0
    %v109 = vpop.f32.mrb[0].mxu0
    %v110 = vadd.f32 0.0, %v109
    %v111 = vpop.f32.mrb[0].mxu0
    %112 = vmatprep.mubr.bf16.mxu0 0
    %113 = vmatmul.mubr.bf16.gmra.mrb[0].mxu0 %v52
    %v114 = vpop.f32.mrb[0].mxu0
    %v115 = vadd.f32 0.0, %v114
    %v116 = vpop.f32.mrb[0].mxu0
    %v117 = vpop.f32.mrb[0].mxu0
    %v118 = vadd.f32 0.0, %v117
    %v119 = vpop.f32.mrb[0].mxu0
    %120 = vmatprep.mubr.bf16.mxu0 0
    %121 = vmatmul.mubr.bf16.gmra.mrb[0].mxu0 %v55
    %v122 = vpop.f32.mrb[0].mxu0
    %v123 = vadd.f32 0.0, %v122
    %v124 = vpop.f32.mrb[0].mxu0
    %v125 = vpop.f32.mrb[0].mxu0
    %v126 = vadd.f32 0.0, %v125
    %v127 = vpop.f32.mrb[0].mxu0
    %128 = vmatprep.mubr.bf16.mxu0 0
    %129 = vmatmul.mubr.bf16.gmra.mrb[0].mxu0 %v58
    %v130 = vpop.f32.mrb[0].mxu0
    %v131 = vadd.f32 0.0, %v130
    %v132 = vpop.f32.mrb[0].mxu0
    %v133 = vpop.f32.mrb[0].mxu0
    %v134 = vadd.f32 0.0, %v133
    %v135 = vpop.f32.mrb[0].mxu0
    %136 = vmatprep.mubr.bf16.mxu0 0
    %137 = vmatmul.mubr.bf16.gmra.mrb[0].mxu0 %v61
    %v138 = vpop.f32.mrb[0].mxu0
    %v139 = vadd.f32 0.0, %v138
    %v140 = vpop.f32.mrb[0].mxu0
    %v141 = vpop.f32.mrb[0].mxu0
    %v142 = vadd.f32 0.0, %v141
    %v143 = vpop.f32.mrb[0].mxu0
    %144 = vmatprep.mubr.bf16.mxu0 0
    %145 = vmatmul.mubr.bf16.gmra.mrb[0].mxu0 %v64
    %v146 = vpop.f32.mrb[0].mxu0
    %v147 = vadd.f32 0.0, %v146
    %v148 = vpop.f32.mrb[0].mxu0
    %v149 = vpop.f32.mrb[0].mxu0
    %v150 = vadd.f32 0.0, %v149
    %v151 = vpop.f32.mrb[0].mxu0
    %152 = vmatprep.mubr.bf16.mxu0 0
    %153 = vmatmul.mubr.bf16.gmra.mrb[0].mxu0 %v67
    %v154 = vpop.f32.mrb[0].mxu0
    %v155 = vadd.f32 0.0, %v154
    %v156 = vpop.f32.mrb[0].mxu0
    %v157 = vpop.f32.mrb[0].mxu0
    %v158 = vadd.f32 0.0, %v157
    %v159 = vpop.f32.mrb[0].mxu0
    %160 = vmatprep.mubr.bf16.mxu0 0
    %161 = vmatmul.mubr.bf16.gmra.mrb[0].mxu0 %v70
    %v162 = vpop.f32.mrb[0].mxu0
    %v163 = vadd.f32 0.0, %v162
    %v164 = vpop.f32.mrb[0].mxu0
    %v165 = vpop.f32.mrb[0].mxu0
    %v166 = vadd.f32 0.0, %v165
    %v167 = vpop.f32.mrb[0].mxu0
    %168 = vdwg.mxu0
    %v169 = vpack.c.bf16 %v110, %v107
    %v170 = vpack.c.bf16 %v118, %v115
    %v171 = vpack.c.bf16 %v126, %v123
    %v172 = vpack.c.bf16 %v134, %v131
    %v173 = vpack.c.bf16 %v142, %v139
    %v174 = vpack.c.bf16 %v150, %v147
    %v175 = vpack.c.bf16 %v158, %v155
    %v176 = vpack.c.bf16 %v166, %v163
    %v185 = vunpack.c.l.b16 %v169
    %v186 = vunpack.c.h.b16 %v169
    %v187 = vunpack.c.l.b16 %v170
    %v188 = vunpack.c.h.b16 %v170
    %v189 = vunpack.c.l.b16 %v171
    %v190 = vunpack.c.h.b16 %v171
    %v191 = vunpack.c.l.b16 %v172
    %v192 = vunpack.c.h.b16 %v172
    %v193 = vunpack.c.l.b16 %v173
    %v194 = vunpack.c.h.b16 %v173
    %v195 = vunpack.c.l.b16 %v174
    %v196 = vunpack.c.h.b16 %v174
    %v197 = vunpack.c.l.b16 %v175
    %v198 = vunpack.c.h.b16 %v175
    %v199 = vunpack.c.l.b16 %v176
    %v200 = vunpack.c.h.b16 %v176
    %v201 = vpack.c.b16 %v185, %v185
    %v202 = vpack.c.b16 %v186, %v186
    %v203 = vpack.c.b16 %v187, %v187
    %v204 = vpack.c.b16 %v188, %v188
    %v205 = vpack.c.b16 %v189, %v189
    %v206 = vpack.c.b16 %v190, %v190
    %v207 = vpack.c.b16 %v191, %v191
    %v208 = vpack.c.b16 %v192, %v192
    %v209 = vpack.c.b16 %v193, %v193
    %v210 = vpack.c.b16 %v194, %v194
    %v211 = vpack.c.b16 %v195, %v195
    %v212 = vpack.c.b16 %v196, %v196
    %v213 = vpack.c.b16 %v197, %v197
    %v214 = vpack.c.b16 %v198, %v198
    %v215 = vpack.c.b16 %v199, %v199
    %v216 = vpack.c.b16 %v200, %v200
    %vm233 = vcmask 27648
    %234 = vst.msk [vmem:[%s2] sm:$0xf] %vm233, %v201
    %235 = vst.msk [vmem:[%s2 + $0x4] sm:$0xf] %vm233, %v202
    %236 = vst.msk [vmem:[%s2 + $0x8] sm:$0xf] %vm233, %v203
    %237 = vst.msk [vmem:[%s2 + $0xc] sm:$0xf] %vm233, %v204
    %238 = vst.msk [vmem:[%s2 + $0x10] sm:$0xf] %vm233, %v205
    %239 = vst.msk [vmem:[%s2 + $0x14] sm:$0xf] %vm233, %v206
    %240 = vst.msk [vmem:[%s2 + $0x18] sm:$0xf] %vm233, %v207
    %241 = vst.msk [vmem:[%s2 + $0x1c] sm:$0xf] %vm233, %v208
    %242 = vst.msk [vmem:[%s2 + $0x20] sm:$0xf] %vm233, %v209
    %243 = vst.msk [vmem:[%s2 + $0x24] sm:$0xf] %vm233, %v210
    %244 = vst.msk [vmem:[%s2 + $0x28] sm:$0xf] %vm233, %v211
    %245 = vst.msk [vmem:[%s2 + $0x2c] sm:$0xf] %vm233, %v212
    %246 = vst.msk [vmem:[%s2 + $0x30] sm:$0xf] %vm233, %v213
    %247 = vst.msk [vmem:[%s2 + $0x34] sm:$0xf] %vm233, %v214
    %248 = vst.msk [vmem:[%s2 + $0x38] sm:$0xf] %vm233, %v215
    %249 = vst.msk [vmem:[%s2 + $0x3c] sm:$0xf] %vm233, %v216
    %vm250 = vcmask 31744
    %v251 = vsel %vm250, %v107, 0.0
    %v252 = vsel %vm250, %v110, 0.0
    %v253 = vadd.f32 %v251, %v252
    %v254 = vsel %vm250, %v115, 0.0
    %v255 = vadd.f32 %v253, %v254
    %v256 = vsel %vm250, %v118, 0.0
    %v257 = vadd.f32 %v255, %v256
    %v258 = vsel %vm250, %v123, 0.0
    %v259 = vadd.f32 %v257, %v258
    %v260 = vsel %vm250, %v126, 0.0
    %v261 = vadd.f32 %v259, %v260
    %v262 = vsel %vm250, %v131, 0.0
    %v263 = vadd.f32 %v261, %v262
    %v264 = vsel %vm250, %v134, 0.0
    %v265 = vadd.f32 %v263, %v264
    %v266 = vsel %vm250, %v139, 0.0
    %v267 = vadd.f32 %v265, %v266
    %v268 = vsel %vm250, %v142, 0.0
    %v269 = vadd.f32 %v267, %v268
    %v270 = vsel %vm250, %v147, 0.0
    %v271 = vadd.f32 %v269, %v270
    %v272 = vsel %vm250, %v150, 0.0
    %v273 = vadd.f32 %v271, %v272
    %v274 = vsel %vm250, %v155, 0.0
    %v275 = vadd.f32 %v273, %v274
    %v276 = vsel %vm250, %v158, 0.0
    %v277 = vadd.f32 %v275, %v276
    %v278 = vsel %vm250, %v163, 0.0
    %v279 = vadd.f32 %v277, %v278
    %v280 = vsel %vm250, %v166, 0.0
    %v281 = vadd.f32 %v279, %v280
    %v282 = vrot.slane %v281, 4
    %v283 = vadd.f32 %v281, %v282
    %v284 = vrot.slane %v283, 2
    %v285 = vadd.f32 %v283, %v284
    %v286 = vrot.slane %v285, 1
    %v287 = vadd.f32 %v285, %v286
    %v288 = vmul.f32 %v287, 0.0078125
    %v289 = vsub.f32 %v107, %v288
    %v290 = vsub.f32 %v110, %v288
    %v291 = vsub.f32 %v115, %v288
    %v292 = vsub.f32 %v118, %v288
    %v293 = vsub.f32 %v123, %v288
    %v294 = vsub.f32 %v126, %v288
    %v295 = vsub.f32 %v131, %v288
    %v296 = vsub.f32 %v134, %v288
    %v297 = vsub.f32 %v139, %v288
    %v298 = vsub.f32 %v142, %v288
    %v299 = vsub.f32 %v147, %v288
    %v300 = vsub.f32 %v150, %v288
    %v301 = vsub.f32 %v155, %v288
    %v302 = vsub.f32 %v158, %v288
    %v303 = vsub.f32 %v163, %v288
    %v304 = vsub.f32 %v166, %v288
    %v305 = vmul.f32 %v289, %v289
    %v306 = vmul.f32 %v290, %v290
    %v307 = vmul.f32 %v291, %v291
    %v308 = vmul.f32 %v292, %v292
    %v309 = vmul.f32 %v293, %v293
    %v310 = vmul.f32 %v294, %v294
    %v311 = vmul.f32 %v295, %v295
    %v312 = vmul.f32 %v296, %v296
    %v313 = vmul.f32 %v297, %v297
    %v314 = vmul.f32 %v298, %v298
    %v315 = vmul.f32 %v299, %v299
    %v316 = vmul.f32 %v300, %v300
    %v317 = vmul.f32 %v301, %v301
    %v318 = vmul.f32 %v302, %v302
    %v319 = vmul.f32 %v303, %v303
    %v320 = vmul.f32 %v304, %v304
    %v321 = vsel %vm250, %v305, 0.0
    %v322 = vsel %vm250, %v306, 0.0
    %v323 = vadd.f32 %v321, %v322
    %v324 = vsel %vm250, %v307, 0.0
    %v325 = vadd.f32 %v323, %v324
    %v326 = vsel %vm250, %v308, 0.0
    %v327 = vadd.f32 %v325, %v326
    %v328 = vsel %vm250, %v309, 0.0
    %v329 = vadd.f32 %v327, %v328
    %v330 = vsel %vm250, %v310, 0.0
    %v331 = vadd.f32 %v329, %v330
    %v332 = vsel %vm250, %v311, 0.0
    %v333 = vadd.f32 %v331, %v332
    %v334 = vsel %vm250, %v312, 0.0
    %v335 = vadd.f32 %v333, %v334
    %v336 = vsel %vm250, %v313, 0.0
    %v337 = vadd.f32 %v335, %v336
    %v338 = vsel %vm250, %v314, 0.0
    %v339 = vadd.f32 %v337, %v338
    %v340 = vsel %vm250, %v315, 0.0
    %v341 = vadd.f32 %v339, %v340
    %v342 = vsel %vm250, %v316, 0.0
    %v343 = vadd.f32 %v341, %v342
    %v344 = vsel %vm250, %v317, 0.0
    %v345 = vadd.f32 %v343, %v344
    %v346 = vsel %vm250, %v318, 0.0
    %v347 = vadd.f32 %v345, %v346
    %v348 = vsel %vm250, %v319, 0.0
    %v349 = vadd.f32 %v347, %v348
    %v350 = vsel %vm250, %v320, 0.0
    %v351 = vadd.f32 %v349, %v350
    %v352 = vrot.slane %v351, 4
    %v353 = vadd.f32 %v351, %v352
    %v354 = vrot.slane %v353, 2
    %v355 = vadd.f32 %v353, %v354
    %v356 = vrot.slane %v355, 1
    %v357 = vadd.f32 %v355, %v356
    %359 = vrot.lane.b32.xlu0 %v357, 4
    %v360 = vpop.permute.xlu0 %359
    %v362 = vsel %vm250, %v287, %v360
    %vm363 = vcmask 57344
    %364 = vst.msk [vmem:[#allocation2] sm:$0x1] %vm363, %v362
    // Predicated region
    $region10: #{tpu_custom_call.1} parent=1 // pred_check
      _
    $region11: #{tpu_custom_call.1} parent=1 // pred_check_branch
      %366 = sbr.rel (0) target = $region13
    $region12: #{tpu_custom_call.1} parent=1 // pred_region
      _
    $region13: #{tpu_custom_call.1} parent=1 // pred_fallthru
      _
    // Predicated region
    $region14: #{tpu_custom_call.1} parent=1 // pred_check
      _
    $region15: #{tpu_custom_call.1} parent=1 // pred_check_branch
      %368 = sbr.rel (0) target = $region17
    $region16: #{tpu_custom_call.1} parent=1 // pred_region
      %s370 = ssub.s32 16, 16
      %371 = vsyncadd [#allocation3], %s370
      %s373 = sshll.u32 [#allocation2], 4
      %s374 = int_to_ptr.vmem [resolvable:$true] %s373
      %376 = dma.vmem_to_hbm [thread:$0]  %s374, 16, %s3, [#allocation3]
    $region17: #{tpu_custom_call.1} parent=1 // pred_fallthru
      _
    // Predicated region
    $region18: #{tpu_custom_call.1} parent=1 // pred_check
      _
    $region19: #{tpu_custom_call.1} parent=1 // pred_check_branch
      %378 = sbr.rel (0) target = $region21
    $region20: #{tpu_custom_call.1} parent=1 // pred_region
      _
    $region21: #{tpu_custom_call.1} parent=1 // pred_fallthru
      _
    // Predicated region
    $region22: #{tpu_custom_call.1} parent=1 // pred_check
      _
    $region23: #{tpu_custom_call.1} parent=1 // pred_check_branch
      %380 = sbr.rel (0) target = $region25
    $region24: #{tpu_custom_call.1} parent=1 // pred_region
      %381 = dma.done [#allocation3], 16
    $region25: #{tpu_custom_call.1} parent=1 // pred_fallthru
      _
    %382 = vsyncpa [#allocation3], 1

</llo_original>
